<compile_context>
chip_gen: v5e
topology: v5e:2x2
jax: 0.10.0
libtpu: 0.0.40
codegen_flags: <defaults>
</compile_context>

<pallas_src>
import jax
import jax.numpy as jnp
from jax import lax
from jax.experimental import pallas as pl
from jax.experimental.pallas import tpu as pltpu

BN_EPS = 1e-5
HIDDEN = 256
D_OUT = 64
VMEM_LIMIT = 32 * 1024 * 1024  # fits the default scoped budget on v5e/v6e/v7x


def _round_up(x, m):
    return (x + m - 1) // m * m


# ----------------------------------------------------------------------------
# Pass 1: K-tiled Linear-1 + exact batch statistics -> fused BN scale/shift
# ----------------------------------------------------------------------------
def _make_pass1_kernel(batch_rows):
    inv_n = 1.0 / float(batch_rows)

    def kernel(x_ref, w1_ref, g_ref, bt_ref, h_ref, aff_ref,
               acc_ref, ssum_ref, ssq_ref):
        b = pl.program_id(0)
        k = pl.program_id(1)
        nb = pl.num_programs(0)
        nk = pl.num_programs(1)

        @pl.when(jnp.logical_and(b == 0, k == 0))
        def _():
            ssum_ref[...] = jnp.zeros_like(ssum_ref)
            ssq_ref[...] = jnp.zeros_like(ssq_ref)

        @pl.when(k == 0)
        def _():
            acc_ref[...] = jnp.zeros_like(acc_ref)

        # K-tiled Linear 1 on the MXU (f32 accumulation). b1 intentionally
        # omitted: it cancels exactly under training-mode BatchNorm.
        acc_ref[...] += jnp.dot(x_ref[...], w1_ref[...],
                                preferred_element_type=jnp.float32)

        @pl.when(k == nk - 1)
        def _():
            h = acc_ref[...]
            h_ref[...] = h.astype(h_ref.dtype)
            ssum_ref[...] += jnp.sum(h, axis=0, keepdims=True)
            ssq_ref[...] += jnp.sum(h * h, axis=0, keepdims=True)

        @pl.when(jnp.logical_and(b == nb - 1, k == nk - 1))
        def _():
            mean = ssum_ref[...] * inv_n
            var = jnp.maximum(ssq_ref[...] * inv_n - mean * mean, 0.0)
            inv_std = lax.rsqrt(var + BN_EPS)          # EUP slot (cheap)
            scale = g_ref[...] * inv_std
            shift = bt_ref[...] - mean * scale
            aff_ref[0:1, :] = scale
            aff_ref[1:2, :] = shift

    return kernel


# ----------------------------------------------------------------------------
# Pass 2: fused BN affine + ReLU + Linear-2 (lane-dense padded output)
# ----------------------------------------------------------------------------
def _pass2_kernel(h_ref, aff_ref, w2_ref, b2_ref, o_ref):
    h = h_ref[...]                       # f32
    scale = aff_ref[0:1, :]
    shift = aff_ref[1:2, :]
    hn = jnp.maximum(h * scale + shift, 0.0)           # f32 VPU math
    hn = hn.astype(w2_ref.dtype)                        # cast only for the MXU
    o_ref[...] = (jnp.dot(hn, w2_ref[...], preferred_element_type=jnp.float32)
                  + b2_ref[...]).astype(o_ref.dtype)


# ----------------------------------------------------------------------------
# Wrapper
# ----------------------------------------------------------------------------
def proj_head_forward(x, params, compute_dtype=jnp.float32):
    """x: (B, ...) flattened to (B, D_in) like x.view(B, -1); returns (B, 64)."""
    w1, b1, gamma, beta, w2, b2 = params  # b1 unused by design (exact BN cancel)
    del b1

    B = x.shape[0]
    x2d = x.reshape(B, -1)
    D_in, H = w1.shape
    D_out = w2.shape[1]
    assert H == HIDDEN and x2d.shape[1] == D_in

    # Tile choices: batch tiles multiple of 8 (f32 sublane), K tiles multiple
    # of 128 (lanes), output padded to a lane-dense 128 columns.
    tile_b = min(256, _round_up(B, 8))
    b_pad = _round_up(B, tile_b)
    tile_k = min(512, _round_up(D_in, 128))
    k_pad = _round_up(D_in, tile_k)
    d_out_pad = _round_up(max(D_out, 128), 128)
    nb = b_pad // tile_b
    nk = k_pad // tile_k

    cdt = jnp.dtype(compute_dtype)

    # Zero padding is exact: padded K columns/rows contribute 0 to x@w1, and
    # padded batch rows give h == 0 (no bias), so stats use the true B below.
    xp = jnp.zeros((b_pad, k_pad), cdt).at[:B, :D_in].set(x2d.astype(cdt))
    w1p = jnp.zeros((k_pad, H), cdt).at[:D_in, :].set(w1.astype(cdt))
    w2p = jnp.zeros((H, d_out_pad), cdt).at[:, :D_out].set(w2.astype(cdt))
    b2p = jnp.zeros((1, d_out_pad), jnp.float32).at[:, :D_out].set(
        b2.reshape(1, D_out).astype(jnp.float32))
    g = gamma.reshape(1, H).astype(jnp.float32)
    bt = beta.reshape(1, H).astype(jnp.float32)

    itemsize = int(cdt.itemsize)

    # -------- pass 1: h = x @ w1  (+ batch stats -> fused scale/shift) -------
    h, affine = pl.pallas_call(
        _make_pass1_kernel(B),
        out_shape=(jax.ShapeDtypeStruct((b_pad, H), jnp.float32),
                   jax.ShapeDtypeStruct((2, H), jnp.float32)),
        grid_spec=pltpu.PrefetchScalarGridSpec(
            num_scalar_prefetch=0,
            grid=(nb, nk),
            in_specs=[
                pl.BlockSpec((tile_b, tile_k), lambda b, k: (b, k)),
                pl.BlockSpec((tile_k, H), lambda b, k: (k, 0)),
                pl.BlockSpec((1, H), lambda b, k: (0, 0)),
                pl.BlockSpec((1, H), lambda b, k: (0, 0)),
            ],
            out_specs=[
                pl.BlockSpec((tile_b, H), lambda b, k: (b, 0)),
                pl.BlockSpec((2, H), lambda b, k: (0, 0)),
            ],
            scratch_shapes=[
                pltpu.VMEM((tile_b, H), jnp.float32),   # matmul accumulator
                pltpu.VMEM((1, H), jnp.float32),        # sum(h) over batch
                pltpu.VMEM((1, H), jnp.float32),        # sum(h*h) over batch
            ],
        ),
        compiler_params=pltpu.CompilerParams(
            # batch axis carries the stats accumulator -> must be "arbitrary"
            dimension_semantics=("arbitrary", "arbitrary"),
            vmem_limit_bytes=VMEM_LIMIT),
        cost_estimate=pl.CostEstimate(
            flops=2 * b_pad * k_pad * H,
            transcendentals=0,
            bytes_accessed=(b_pad * k_pad + k_pad * H) * itemsize
                           + b_pad * H * 4),
    )(xp, w1p, g, bt)

    # -------- pass 2: BN affine + ReLU + h @ w2 (batch-parallel) -------------
    out = pl.pallas_call(
        _pass2_kernel,
        out_shape=jax.ShapeDtypeStruct((b_pad, d_out_pad), jnp.float32),
        grid_spec=pltpu.PrefetchScalarGridSpec(
            num_scalar_prefetch=0,
            grid=(nb,),
            in_specs=[
                pl.BlockSpec((tile_b, H), lambda b: (b, 0)),
                pl.BlockSpec((2, H), lambda b: (0, 0)),
                pl.BlockSpec((H, d_out_pad), lambda b: (0, 0)),
                pl.BlockSpec((1, d_out_pad), lambda b: (0, 0)),
            ],
            out_specs=pl.BlockSpec((tile_b, d_out_pad), lambda b: (b, 0)),
        ),
        compiler_params=pltpu.CompilerParams(
            dimension_semantics=("parallel",),          # 2 TCs on v7x
            vmem_limit_bytes=VMEM_LIMIT),
        cost_estimate=pl.CostEstimate(
            flops=2 * b_pad * H * d_out_pad,
            transcendentals=0,
            bytes_accessed=b_pad * H * 4 + H * d_out_pad * itemsize
                           + b_pad * d_out_pad * 4),
    )(h, affine, w2p, b2p)

    return out[:B, :D_out]


# ----------------------------------------------------------------------------
# Params / reference
# ----------------------------------------------------------------------------
def init_params(key, input_length, hidden=HIDDEN, out_dim=D_OUT):
    """Deterministic synthetic init (PyTorch-like uniform bounds)."""
    k1, k2, k3, k4, k5, k6 = jax.random.split(key, 6)
    bound1 = 1.0 / (input_length ** 0.5)
    bound2 = 1.0 / (hidden ** 0.5)
    # Stored already transposed: (in, out), so the kernel does x @ w.
    w1 = jax.random.uniform(k1, (input_length, hidden), jnp.float32, -bound1, bound1)
    b1 = jax.random.uniform(k2, (1, hidden), jnp.float32, -bound1, bound1)
    # Slightly perturbed BN affine so the gamma/beta path is exercised.
    gamma = 1.0 + 0.1 * jax.random.uniform(k5, (1, hidden), jnp.float32, -1.0, 1.0)
    beta = 0.1 * jax.random.uniform(k6, (1, hidden), jnp.float32, -1.0, 1.0)
    w2 = jax.random.uniform(k3, (hidden, out_dim), jnp.float32, -bound2, bound2)
    b2 = jax.random.uniform(k4, (1, out_dim), jnp.float32, -bound2, bound2)
    return (w1, b1, gamma, beta, w2, b2)


def reference_forward(x, params):
    """Pure-JAX reference matching the PyTorch forward (training-mode BN)."""
    B = x.shape[0]
    x2d = x.reshape(B, -1).astype(jnp.float32)
    w1, b1, gamma, beta, w2, b2 = params
    h = x2d @ w1 + b1
    mean = jnp.mean(h, axis=0, keepdims=True)
    var = jnp.mean((h - mean) ** 2, axis=0, keepdims=True)
    h = (h - mean) / jnp.sqrt(var + BN_EPS) * gamma + beta
    h = jnp.maximum(h, 0.0)
    return h @ w2 + b2


if __name__ == "__main__":
    key = jax.random.PRNGKey(0)
    kx, kp = jax.random.split(key)

    # Small shapes: batch=8, channels=4, seq=16 -> input_length = 4*16 = 64
    B, C, L = 8, 4, 16
    input_length = C * L
    x = jax.random.normal(kx, (B, C, L), jnp.float32)
    params = init_params(kp, input_length)

    ref = reference_forward(x, params)

    # f32 path: must match the PyTorch-style reference tightly.
    out32 = jax.block_until_ready(proj_head_forward(x, params, jnp.float32))
    assert out32.shape == (B, D_OUT), out32.shape
    assert jnp.allclose(out32, ref, atol=1e-4, rtol=1e-4), "f32 mismatch vs reference"

    # bf16 storage/compute path (halves DMA bytes); looser tolerance.
    out16 = jax.block_until_ready(proj_head_forward(x, params, jnp.bfloat16))
    assert out16.shape == (B, D_OUT), out16.shape
    assert float(jnp.max(jnp.abs(out16 - ref))) < 0.1, "bf16 mismatch vs reference"

    print("KERNEL_OK")
</pallas_src>

<mosaic_0001>
module attributes {stable_mosaic.version = 11 : i64} {
  func.func @kernel(%arg0: i32, %arg1: i32, %arg2: memref<8x128xf32, #tpu.memory_space<vmem>>, %arg3: memref<128x256xf32, #tpu.memory_space<vmem>>, %arg4: memref<1x256xf32, #tpu.memory_space<vmem>>, %arg5: memref<1x256xf32, #tpu.memory_space<vmem>>, %arg6: memref<8x256xf32, #tpu.memory_space<vmem>>, %arg7: memref<2x256xf32, #tpu.memory_space<vmem>>, %arg8: memref<8x256xf32, #tpu.memory_space<vmem>>, %arg9: memref<1x256xf32, #tpu.memory_space<vmem>>, %arg10: memref<1x256xf32, #tpu.memory_space<vmem>>) attributes {dimension_semantics = [#tpu.dimension_semantics<arbitrary>, #tpu.dimension_semantics<arbitrary>], iteration_bounds = array<i64: 1, 1>, scalar_prefetch = 0 : i64, scratch_operands = 3 : i64, tpu.core_type = #tpu.core_type<tc>, window_params = [{transform_indices = @transform_0, window_bounds = array<i64: 8, 128>}, {transform_indices = @transform_1, window_bounds = array<i64: 128, 256>}, {pipeline_mode = #tpu.pipeline_mode<synchronous>, transform_indices = @transform_2, window_bounds = array<i64: 1, 256>}, {pipeline_mode = #tpu.pipeline_mode<synchronous>, transform_indices = @transform_3, window_bounds = array<i64: 1, 256>}, {transform_indices = @transform_4, window_bounds = array<i64: 8, 256>}, {pipeline_mode = #tpu.pipeline_mode<synchronous>, transform_indices = @transform_5, window_bounds = array<i64: 2, 256>}]} {
    %c0_i32 = arith.constant 0 : i32
    %0 = arith.cmpi eq, %arg0, %c0_i32 : i32
    %c0_i32_0 = arith.constant 0 : i32
    %1 = arith.cmpi eq, %arg1, %c0_i32_0 : i32
    %2 = arith.andi %0, %1 : i1
    %3 = arith.extui %2 : i1 to i32
    %c0_i32_1 = arith.constant 0 : i32
    %4 = arith.cmpi ne, %3, %c0_i32_1 : i32
    scf.if %4 {
      %cst_16 = arith.constant 0.000000e+00 : f32
      %22 = vector.broadcast %cst_16 : f32 to vector<1x256xf32>
      %c0_17 = arith.constant 0 : index
      %c0_18 = arith.constant 0 : index
      %23 = vector.load %arg9[%c0_17, %c0_18] : memref<1x256xf32, #tpu.memory_space<vmem>>, vector<1x256xf32>
      tpu.vector_store %arg9[%c0_17, %c0_18], %22 {strides = array<i32>} : memref<1x256xf32, #tpu.memory_space<vmem>>, vector<1x256xf32>,
      %cst_19 = arith.constant 0.000000e+00 : f32
      %24 = vector.broadcast %cst_19 : f32 to vector<1x256xf32>
      %c0_20 = arith.constant 0 : index
      %c0_21 = arith.constant 0 : index
      %25 = vector.load %arg10[%c0_20, %c0_21] : memref<1x256xf32, #tpu.memory_space<vmem>>, vector<1x256xf32>
      tpu.vector_store %arg10[%c0_20, %c0_21], %24 {strides = array<i32>} : memref<1x256xf32, #tpu.memory_space<vmem>>, vector<1x256xf32>,
    } else {
    }
    %c0_i32_2 = arith.constant 0 : i32
    %5 = arith.cmpi eq, %arg1, %c0_i32_2 : i32
    %6 = arith.extui %5 : i1 to i32
    %c0_i32_3 = arith.constant 0 : i32
    %7 = arith.cmpi ne, %6, %c0_i32_3 : i32
    scf.if %7 {
      %cst_16 = arith.constant 0.000000e+00 : f32
      %22 = vector.broadcast %cst_16 : f32 to vector<8x256xf32>
      %c0_17 = arith.constant 0 : index
      %c0_18 = arith.constant 0 : index
      %23 = vector.load %arg8[%c0_17, %c0_18] : memref<8x256xf32, #tpu.memory_space<vmem>>, vector<8x256xf32>
      tpu.vector_store %arg8[%c0_17, %c0_18], %22 {strides = array<i32>} : memref<8x256xf32, #tpu.memory_space<vmem>>, vector<8x256xf32>,
    } else {
    }
    %c0 = arith.constant 0 : index
    %c0_4 = arith.constant 0 : index
    %8 = vector.load %arg8[%c0, %c0_4] : memref<8x256xf32, #tpu.memory_space<vmem>>, vector<8x256xf32>
    %c0_5 = arith.constant 0 : index
    %c0_6 = arith.constant 0 : index
    %9 = vector.load %arg2[%c0_5, %c0_6] : memref<8x128xf32, #tpu.memory_space<vmem>>, vector<8x128xf32>
    %c0_7 = arith.constant 0 : index
    %c0_8 = arith.constant 0 : index
    %10 = vector.load %arg3[%c0_7, %c0_8] : memref<128x256xf32, #tpu.memory_space<vmem>>, vector<128x256xf32>
    %cst = arith.constant dense<0.000000e+00> : vector<8x256xf32>
    %11 = tpu.matmul %9, %10, %cst {dimension_numbers = #tpu.dot_dimension_numbers<[1], [0], [0], [1], [0, 0, 1, 1], [], []>} : vector<8x128xf32>, vector<128x256xf32>, vector<8x256xf32> -> vector<8x256xf32>
    %12 = arith.addf %8, %11 : vector<8x256xf32>
    %c0_9 = arith.constant 0 : index
    %c0_10 = arith.constant 0 : index
    %13 = vector.load %arg8[%c0_9, %c0_10] : memref<8x256xf32, #tpu.memory_space<vmem>>, vector<8x256xf32>
    tpu.vector_store %arg8[%c0_9, %c0_10], %12 {strides = array<i32>} : memref<8x256xf32, #tpu.memory_space<vmem>>, vector<8x256xf32>,
    %c0_i32_11 = arith.constant 0 : i32
    %14 = arith.cmpi eq, %arg1, %c0_i32_11 : i32
    %15 = arith.extui %14 : i1 to i32
    %c0_i32_12 = arith.constant 0 : i32
    %16 = arith.cmpi ne, %15, %c0_i32_12 : i32
    scf.if %16 {
      %c0_16 = arith.constant 0 : index
      %c0_17 = arith.constant 0 : index
      %22 = vector.load %arg8[%c0_16, %c0_17] : memref<8x256xf32, #tpu.memory_space<vmem>>, vector<8x256xf32>
      %c0_18 = arith.constant 0 : index
      %c0_19 = arith.constant 0 : index
      %23 = vector.load %arg6[%c0_18, %c0_19] : memref<8x256xf32, #tpu.memory_space<vmem>>, vector<8x256xf32>
      tpu.vector_store %arg6[%c0_18, %c0_19], %22 {strides = array<i32>} : memref<8x256xf32, #tpu.memory_space<vmem>>, vector<8x256xf32>,
      %c0_20 = arith.constant 0 : index
      %c0_21 = arith.constant 0 : index
      %24 = vector.load %arg9[%c0_20, %c0_21] : memref<1x256xf32, #tpu.memory_space<vmem>>, vector<1x256xf32>
      %cst_22 = arith.constant dense<0.000000e+00> : vector<256xf32>
      %25 = vector.multi_reduction <add>, %22, %cst_22 [0] : vector<8x256xf32> to vector<256xf32>
      %26 = vector.shape_cast %25 : vector<256xf32> to vector<1x256xf32>
      %27 = arith.addf %24, %26 : vector<1x256xf32>
      %c0_23 = arith.constant 0 : index
      %c0_24 = arith.constant 0 : index
      %28 = vector.load %arg9[%c0_23, %c0_24] : memref<1x256xf32, #tpu.memory_space<vmem>>, vector<1x256xf32>
      tpu.vector_store %arg9[%c0_23, %c0_24], %27 {strides = array<i32>} : memref<1x256xf32, #tpu.memory_space<vmem>>, vector<1x256xf32>,
      %c0_25 = arith.constant 0 : index
      %c0_26 = arith.constant 0 : index
      %29 = vector.load %arg10[%c0_25, %c0_26] : memref<1x256xf32, #tpu.memory_space<vmem>>, vector<1x256xf32>
      %30 = arith.mulf %22, %22 : vector<8x256xf32>
      %cst_27 = arith.constant dense<0.000000e+00> : vector<256xf32>
      %31 = vector.multi_reduction <add>, %30, %cst_27 [0] : vector<8x256xf32> to vector<256xf32>
      %32 = vector.shape_cast %31 : vector<256xf32> to vector<1x256xf32>
      %33 = arith.addf %29, %32 : vector<1x256xf32>
      %c0_28 = arith.constant 0 : index
      %c0_29 = arith.constant 0 : index
      %34 = vector.load %arg10[%c0_28, %c0_29] : memref<1x256xf32, #tpu.memory_space<vmem>>, vector<1x256xf32>
      tpu.vector_store %arg10[%c0_28, %c0_29], %33 {strides = array<i32>} : memref<1x256xf32, #tpu.memory_space<vmem>>, vector<1x256xf32>,
    } else {
    }
    %c0_i32_13 = arith.constant 0 : i32
    %17 = arith.cmpi eq, %arg0, %c0_i32_13 : i32
    %c0_i32_14 = arith.constant 0 : i32
    %18 = arith.cmpi eq, %arg1, %c0_i32_14 : i32
    %19 = arith.andi %17, %18 : i1
    %20 = arith.extui %19 : i1 to i32
    %c0_i32_15 = arith.constant 0 : i32
    %21 = arith.cmpi ne, %20, %c0_i32_15 : i32
    scf.if %21 {
      %c0_16 = arith.constant 0 : index
      %c0_17 = arith.constant 0 : index
      %22 = vector.load %arg9[%c0_16, %c0_17] : memref<1x256xf32, #tpu.memory_space<vmem>>, vector<1x256xf32>
      %cst_18 = arith.constant 1.250000e-01 : f32
      %23 = vector.broadcast %cst_18 : f32 to vector<1x256xf32>
      %24 = arith.mulf %22, %23 : vector<1x256xf32>
      %c0_19 = arith.constant 0 : index
      %c0_20 = arith.constant 0 : index
      %25 = vector.load %arg10[%c0_19, %c0_20] : memref<1x256xf32, #tpu.memory_space<vmem>>, vector<1x256xf32>
      %cst_21 = arith.constant 1.250000e-01 : f32
      %26 = vector.broadcast %cst_21 : f32 to vector<1x256xf32>
      %27 = arith.mulf %25, %26 : vector<1x256xf32>
      %28 = arith.mulf %24, %24 : vector<1x256xf32>
      %29 = arith.subf %27, %28 : vector<1x256xf32>
      %cst_22 = arith.constant 0.000000e+00 : f32
      %30 = vector.broadcast %cst_22 : f32 to vector<1x256xf32>
      %31 = arith.maximumf %29, %30 : vector<1x256xf32>
      %cst_23 = arith.constant 9.99999974E-6 : f32
      %32 = vector.broadcast %cst_23 : f32 to vector<1x256xf32>
      %33 = arith.addf %31, %32 : vector<1x256xf32>
      %34 = math.rsqrt %33 : vector<1x256xf32>
      %c0_24 = arith.constant 0 : index
      %c0_25 = arith.constant 0 : index
      %35 = vector.load %arg4[%c0_24, %c0_25] : memref<1x256xf32, #tpu.memory_space<vmem>>, vector<1x256xf32>
      %36 = arith.mulf %35, %34 : vector<1x256xf32>
      %c0_26 = arith.constant 0 : index
      %c0_27 = arith.constant 0 : index
      %37 = vector.load %arg5[%c0_26, %c0_27] : memref<1x256xf32, #tpu.memory_space<vmem>>, vector<1x256xf32>
      %38 = arith.mulf %24, %36 : vector<1x256xf32>
      %39 = arith.subf %37, %38 : vector<1x256xf32>
      %c0_28 = arith.constant 0 : index
      %c0_29 = arith.constant 0 : index
      %40 = vector.load %arg7[%c0_28, %c0_29] : memref<2x256xf32, #tpu.memory_space<vmem>>, vector<1x256xf32>
      tpu.vector_store %arg7[%c0_28, %c0_29], %36 {strides = array<i32>} : memref<2x256xf32, #tpu.memory_space<vmem>>, vector<1x256xf32>,
      %c1 = arith.constant 1 : index
      %c0_30 = arith.constant 0 : index
      %41 = vector.load %arg7[%c1, %c0_30] : memref<2x256xf32, #tpu.memory_space<vmem>>, vector<1x256xf32>
      tpu.vector_store %arg7[%c1, %c0_30], %39 {strides = array<i32>} : memref<2x256xf32, #tpu.memory_space<vmem>>, vector<1x256xf32>,
    } else {
    }
    return
  }
  func.func @transform_0(%arg0: i32, %arg1: i32) -> (i32, i32) {
    %c0_i32 = arith.constant 0 : i32
    return %arg0, %arg1 : i32, i32
  }
  func.func @transform_1(%arg0: i32, %arg1: i32) -> (i32, i32) {
    %c0_i32 = arith.constant 0 : i32
    %c0_i32_0 = arith.constant 0 : i32
    return %arg1, %c0_i32 : i32, i32
  }
  func.func @transform_2(%arg0: i32, %arg1: i32) -> (i32, i32) {
    %c0_i32 = arith.constant 0 : i32
    %c0_i32_0 = arith.constant 0 : i32
    %c0_i32_1 = arith.constant 0 : i32
    return %c0_i32, %c0_i32_0 : i32, i32
  }
  func.func @transform_3(%arg0: i32, %arg1: i32) -> (i32, i32) {
    %c0_i32 = arith.constant 0 : i32
    %c0_i32_0 = arith.constant 0 : i32
    %c0_i32_1 = arith.constant 0 : i32
    return %c0_i32, %c0_i32_0 : i32, i32
  }
  func.func @transform_4(%arg0: i32, %arg1: i32) -> (i32, i32) {
    %c0_i32 = arith.constant 0 : i32
    %c0_i32_0 = arith.constant 0 : i32
    return %arg0, %c0_i32 : i32, i32
  }
  func.func @transform_5(%arg0: i32, %arg1: i32) -> (i32, i32) {
    %c0_i32 = arith.constant 0 : i32
    %c0_i32_0 = arith.constant 0 : i32
    %c0_i32_1 = arith.constant 0 : i32
    return %c0_i32, %c0_i32_0 : i32, i32
  }
}

</mosaic_0001>

<llo_original>
// kernel: tpu_custom_call.1
$region0: #{tpu_custom_call.1}
  #allocation0 [shape = 'u32[]', space=smem, size = 0x4, offset = 0x4, fixed_abs, tag = 'smem constant byte address 0x4 - core index']
  #allocation1 [shape = 'u32[72,128]{1,0:T(1,128)}', space=vmem, size = 0x9000, scoped, tag = 'internal scratch']
  #allocation2 [shape = 'f32[8,256]{1,0:T(8,128)}', space=vmem, size = 0x2000, scoped, tag = 'scratch operand']
  #allocation3 [shape = 'f32[1,256]{1,0:T(1,128)}', space=vmem, size = 0x400, scoped, tag = 'scratch operand']
  #allocation4 [shape = 'f32[1,256]{1,0:T(1,128)}', space=vmem, size = 0x400, scoped, tag = 'scratch operand']
  %s0 = inlined_call_operand.hbm [shape: f32[8,128], index: 0, kind: input, shape index: {}]
  %s1 = inlined_call_operand.hbm [shape: f32[128,256], index: 1, kind: input, shape index: {}]
  %s2 = inlined_call_operand.hbm [shape: f32[1,256], index: 2, kind: input, shape index: {}]
  %s3 = inlined_call_operand.vmem [shape: f32[1,256], index: 3, kind: input, shape index: {}]
  %s4 = inlined_call_operand.hbm [shape: f32[8,256], index: 4, kind: output, shape index: {0}]
  %s5 = inlined_call_operand.hbm [shape: f32[2,256], index: 5, kind: output, shape index: {1}]
  %6 = xla_tuple %s4, %s5
  %s7 = sld [smem:[#allocation0]]
  $region62: #{tpu_custom_call.1} parent=0
    _
  %s9 = ssub.s32 1, %s7
  %s10 = scalar_select 0, %s9, %s7
  $region1: #{tpu_custom_call.1} parent=0
    #allocation5 [shape = 'u8[4096]{0}', space=vmem, size = 0x1000, scoped, tag = 'input window, operand 0, single buffered']
    #allocation6 [shape = 's32[1]{0}', space=sflag, size = 0x4, scoped, tag = 'scoped memory for tpu_custom_call.1']
    #allocation7 [shape = 's32[1]{0}', space=sflag, size = 0x4, scoped, tag = 'scoped memory for tpu_custom_call.1']
    #allocation8 [shape = 'u8[131072]{0}', space=vmem, size = 0x20000, scoped, tag = 'input window, operand 1, single buffered']
    #allocation9 [shape = 's32[1]{0}', space=sflag, size = 0x4, scoped, tag = 'scoped memory for tpu_custom_call.1']
    #allocation10 [shape = 'u8[1024]{0}', space=vmem, size = 0x400, scoped, tag = 'input window, operand 2, single buffered']
    #allocation11 [shape = 'u8[8192]{0}', space=vmem, size = 0x2000, scoped, tag = 'output window, operand 0, single buffered']
    #allocation12 [shape = 'u8[2048]{0}', space=vmem, size = 0x800, scoped, tag = 'output window, operand 1, single buffered']
    #allocation13 [shape = 's32[1]{0}', space=sflag, size = 0x4, scoped, tag = 'scoped memory for tpu_custom_call.1']
    %11 = vsyncpa [#allocation6], 0
    %12 = vsyncpa [#allocation9], 0
    %13 = vsyncpa [#allocation7], 0
    %14 = vsyncpa [#allocation13], 0
    // Predicated region
    $region2: #{tpu_custom_call.1} parent=1 // pred_check
      _
    $region3: #{tpu_custom_call.1} parent=1 // pred_check_branch
      %16 = sbr.rel (0) target = $region5
    $region4: #{tpu_custom_call.1} parent=1 // pred_region
      %18 = vsyncadd [#allocation6], 0
      %s20 = sshll.u32 %s0, 4
      %s21 = int_to_ptr.hbm [resolvable:$true] %s20
      %s22 = sshll.u32 [#allocation5], 4
      %s23 = int_to_ptr.vmem [resolvable:$true] %s22
      %25 = dma.hbm_to_vmem [thread:$0]  %s21, 128, %s23, [#allocation6]
    $region5: #{tpu_custom_call.1} parent=1 // pred_fallthru
      _
    // Predicated region
    $region6: #{tpu_custom_call.1} parent=1 // pred_check
      _
    $region7: #{tpu_custom_call.1} parent=1 // pred_check_branch
      %27 = sbr.rel (0) target = $region9
    $region8: #{tpu_custom_call.1} parent=1 // pred_region
      %29 = vsyncadd [#allocation9], 0
      %s30 = sshll.u32 %s1, 4
      %s31 = int_to_ptr.hbm [resolvable:$true] %s30
      %s32 = sshll.u32 [#allocation8], 4
      %s33 = int_to_ptr.vmem [resolvable:$true] %s32
      %38 = dma.hbm_to_vmem [thread:$0]  %s31, 4096, %s33, [#allocation9], 256, 256, 16
    $region9: #{tpu_custom_call.1} parent=1 // pred_fallthru
      _
    // Predicated region
    $region10: #{tpu_custom_call.1} parent=1 // pred_check
      _
    $region11: #{tpu_custom_call.1} parent=1 // pred_check_branch
      %40 = sbr.rel (0) target = $region13
    $region12: #{tpu_custom_call.1} parent=1 // pred_region
      %42 = vsyncadd [#allocation9], 0
      %s44 = sshll.u32 %s2, 4
      %s45 = int_to_ptr.hbm [resolvable:$true] %s44
      %s46 = sshll.u32 [#allocation10], 4
      %s47 = int_to_ptr.vmem [resolvable:$true] %s46
      %49 = dma.hbm_to_vmem [thread:$0]  %s45, 32, %s47, [#allocation9]
    $region13: #{tpu_custom_call.1} parent=1 // pred_fallthru
      _
    // Predicated region
    $region14: #{tpu_custom_call.1} parent=1 // pred_check
      _
    $region15: #{tpu_custom_call.1} parent=1 // pred_check_branch
      %51 = sbr.rel (0) target = $region17
    $region16: #{tpu_custom_call.1} parent=1 // pred_region
      _
    $region17: #{tpu_custom_call.1} parent=1 // pred_fallthru
      _
    // Predicated region
    $region18: #{tpu_custom_call.1} parent=1 // pred_check
      _
    $region19: #{tpu_custom_call.1} parent=1 // pred_check_branch
      %53 = sbr.rel (0) target = $region21
    $region20: #{tpu_custom_call.1} parent=1 // pred_region
      %55 = dma.done [#allocation6], 128
    $region21: #{tpu_custom_call.1} parent=1 // pred_fallthru
      _
    // Predicated region
    $region22: #{tpu_custom_call.1} parent=1 // pred_check
      _
    $region23: #{tpu_custom_call.1} parent=1 // pred_check_branch
      %57 = sbr.rel (0) target = $region25
    $region24: #{tpu_custom_call.1} parent=1 // pred_region
      %59 = dma.done [#allocation9], 4096
    $region25: #{tpu_custom_call.1} parent=1 // pred_fallthru
      _
    // Predicated region
    $region26: #{tpu_custom_call.1} parent=1 // pred_check
      _
    $region27: #{tpu_custom_call.1} parent=1 // pred_check_branch
      %61 = sbr.rel (0) target = $region29
    $region28: #{tpu_custom_call.1} parent=1 // pred_region
      %63 = dma.done [#allocation9], 32
    $region29: #{tpu_custom_call.1} parent=1 // pred_fallthru
      _
    %p64 = scmp.eq.s32.totalorder 0, 0
    %p65 = scmp.eq.s32.totalorder 0, 0
    %p66 = pnand %p64, %p65
    %p67 = pneg %p66
    // Predicated region
    $region30: #{tpu_custom_call.1} parent=1 // pred_check
      _
    $region31: #{tpu_custom_call.1} parent=1 // pred_check_branch
      %69 = sbr.rel (%p66) target = $region33
    $region32: #{tpu_custom_call.1} parent=1 // pred_region
      %v70 = vlaneseq
      %vm71 = vcmp.ge.s32.totalorder %v70, 0
      %vm72 = vcmp.lt.s32.totalorder %v70, 256
      %vm73 = vmand %vm71, %vm72
      %74 = vst.msk [vmem:[#allocation3] sm:$0x3] %vm73, 0.0
      %75 = vst.msk [vmem:[#allocation4] sm:$0x3] %vm73, 0.0
    $region33: #{tpu_custom_call.1} parent=1 // pred_fallthru
      _
    // Predicated region
    $region34: #{tpu_custom_call.1} parent=1 // pred_check
      %p76 = pneg %p65
    $region35: #{tpu_custom_call.1} parent=1 // pred_check_branch
      %78 = sbr.rel (%p76) target = $region37
    $region36: #{tpu_custom_call.1} parent=1 // pred_region
      %79 = vst [vmem:[#allocation2] sm:$0xff] 0.0
      %80 = vst [vmem:[#allocation2 + $0x8] sm:$0xff] 0.0
    $region37: #{tpu_custom_call.1} parent=1 // pred_fallthru
      _
    %v81 = vld [vmem:[#allocation2] sm:$0xff]
    %v82 = vld [vmem:[#allocation2 + $0x8] sm:$0xff]
    %v83 = vld [vmem:[#allocation5] sm:$0xff]
    %v84 = vld [vmem:[#allocation8] sm:$0xff]
    %v85 = vld [vmem:[#allocation8 + $0x8] sm:$0xff]
    %v86 = vld [vmem:[#allocation8 + $0x10] sm:$0xff]
    %v87 = vld [vmem:[#allocation8 + $0x18] sm:$0xff]
    %v88 = vld [vmem:[#allocation8 + $0x20] sm:$0xff]
    %v89 = vld [vmem:[#allocation8 + $0x28] sm:$0xff]
    %v90 = vld [vmem:[#allocation8 + $0x30] sm:$0xff]
    %v91 = vld [vmem:[#allocation8 + $0x38] sm:$0xff]
    %v92 = vld [vmem:[#allocation8 + $0x40] sm:$0xff]
    %v93 = vld [vmem:[#allocation8 + $0x48] sm:$0xff]
    %v94 = vld [vmem:[#allocation8 + $0x50] sm:$0xff]
    %v95 = vld [vmem:[#allocation8 + $0x58] sm:$0xff]
    %v96 = vld [vmem:[#allocation8 + $0x60] sm:$0xff]
    %v97 = vld [vmem:[#allocation8 + $0x68] sm:$0xff]
    %v98 = vld [vmem:[#allocation8 + $0x70] sm:$0xff]
    %v99 = vld [vmem:[#allocation8 + $0x78] sm:$0xff]
    %v100 = vld [vmem:[#allocation8 + $0x80] sm:$0xff]
    %v101 = vld [vmem:[#allocation8 + $0x88] sm:$0xff]
    %v102 = vld [vmem:[#allocation8 + $0x90] sm:$0xff]
    %v103 = vld [vmem:[#allocation8 + $0x98] sm:$0xff]
    %v104 = vld [vmem:[#allocation8 + $0xa0] sm:$0xff]
    %v105 = vld [vmem:[#allocation8 + $0xa8] sm:$0xff]
    %v106 = vld [vmem:[#allocation8 + $0xb0] sm:$0xff]
    %v107 = vld [vmem:[#allocation8 + $0xb8] sm:$0xff]
    %v108 = vld [vmem:[#allocation8 + $0xc0] sm:$0xff]
    %v109 = vld [vmem:[#allocation8 + $0xc8] sm:$0xff]
    %v110 = vld [vmem:[#allocation8 + $0xd0] sm:$0xff]
    %v111 = vld [vmem:[#allocation8 + $0xd8] sm:$0xff]
    %v112 = vld [vmem:[#allocation8 + $0xe0] sm:$0xff]
    %v113 = vld [vmem:[#allocation8 + $0xe8] sm:$0xff]
    %v114 = vld [vmem:[#allocation8 + $0xf0] sm:$0xff]
    %v115 = vld [vmem:[#allocation8 + $0xf8] sm:$0xff]
    %116 = vmatpush.msra.mxu0 %v114
    %117 = vmatpush.msra.mxu0 %v112
    %118 = vmatpush.msra.mxu0 %v110
    %119 = vmatpush.msra.mxu0 %v108
    %120 = vmatpush.msra.mxu0 %v106
    %121 = vmatpush.msra.mxu0 %v104
    %122 = vmatpush.msra.mxu0 %v102
    %123 = vmatpush.msra.mxu0 %v100
    %124 = vmatpush.msra.mxu0 %v98
    %125 = vmatpush.msra.mxu0 %v96
    %126 = vmatpush.msra.mxu0 %v94
    %127 = vmatpush.msra.mxu0 %v92
    %128 = vmatpush.msra.mxu0 %v90
    %129 = vmatpush.msra.mxu0 %v88
    %130 = vmatpush.msra.mxu0 %v86
    %131 = vmatpush.msra.mxu0 %v84
    %132 = vmatmul.f32.gmra.mxu0 %v83
    %v133 = vpop.f32.mrf.mxu0
    %v134 = vadd.f32 0.0, %v133
    %135 = vdwg.mxu0
    %136 = vmatpush.msra.mxu0 %v115
    %137 = vmatpush.msra.mxu0 %v113
    %138 = vmatpush.msra.mxu0 %v111
    %139 = vmatpush.msra.mxu0 %v109
    %140 = vmatpush.msra.mxu0 %v107
    %141 = vmatpush.msra.mxu0 %v105
    %142 = vmatpush.msra.mxu0 %v103
    %143 = vmatpush.msra.mxu0 %v101
    %144 = vmatpush.msra.mxu0 %v99
    %145 = vmatpush.msra.mxu0 %v97
    %146 = vmatpush.msra.mxu0 %v95
    %147 = vmatpush.msra.mxu0 %v93
    %148 = vmatpush.msra.mxu0 %v91
    %149 = vmatpush.msra.mxu0 %v89
    %150 = vmatpush.msra.mxu0 %v87
    %151 = vmatpush.msra.mxu0 %v85
    %152 = vmatmul.f32.gmra.mxu0 %v83
    %v153 = vpop.f32.mrf.mxu0
    %v154 = vadd.f32 0.0, %v153
    %155 = vdwg.mxu0
    %v156 = vadd.f32 %v81, %v134
    %v157 = vadd.f32 %v82, %v154
    %158 = vst [vmem:[#allocation2] sm:$0xff] %v156
    %159 = vst [vmem:[#allocation2 + $0x8] sm:$0xff] %v157
    // Predicated region
    $region38: #{tpu_custom_call.1} parent=1 // pred_check
      %p160 = pneg %p65
    $region39: #{tpu_custom_call.1} parent=1 // pred_check_branch
      %162 = sbr.rel (%p160) target = $region41
    $region40: #{tpu_custom_call.1} parent=1 // pred_region
      %v163 = vld [vmem:[#allocation2] sm:$0xff]
      %v164 = vld [vmem:[#allocation2 + $0x8] sm:$0xff]
      %165 = vst [vmem:[#allocation11] sm:$0xff] %v163
      %166 = vst [vmem:[#allocation11 + $0x8] sm:$0xff] %v164
      %v167 = vld [vmem:[#allocation3] sm:$0x3]
      %v168 = vrot.slane %v163, 4
      %v169 = vadd.f32 %v163, %v168
      %v170 = vrot.slane %v169, 2
      %v171 = vadd.f32 %v169, %v170
      %v172 = vrot.slane %v171, 1
      %v173 = vadd.f32 %v171, %v172
      %v174 = vrot.slane %v164, 4
      %v175 = vadd.f32 %v164, %v174
      %v176 = vrot.slane %v175, 2
      %v177 = vadd.f32 %v175, %v176
      %v178 = vrot.slane %v177, 1
      %v179 = vadd.f32 %v177, %v178
      %v182 = vrot.slane %v179, 7
      %vm183 = vcmask 1040384
      %v184 = vsel %vm183, %v173, %v182
      %v186 = vadd.f32 %v167, %v184
      %v187 = vlaneseq
      %vm188 = vcmp.ge.s32.totalorder %v187, 0
      %vm189 = vcmp.lt.s32.totalorder %v187, 256
      %vm190 = vmand %vm188, %vm189
      %191 = vst.msk [vmem:[#allocation3] sm:$0x3] %vm190, %v186
      %v192 = vld [vmem:[#allocation4] sm:$0x3]
      %v193 = vmul.f32 %v163, %v163
      %v194 = vmul.f32 %v164, %v164
      %v195 = vrot.slane %v193, 4
      %v196 = vadd.f32 %v193, %v195
      %v197 = vrot.slane %v196, 2
      %v198 = vadd.f32 %v196, %v197
      %v199 = vrot.slane %v198, 1
      %v200 = vadd.f32 %v198, %v199
      %v201 = vrot.slane %v194, 4
      %v202 = vadd.f32 %v194, %v201
      %v203 = vrot.slane %v202, 2
      %v204 = vadd.f32 %v202, %v203
      %v205 = vrot.slane %v204, 1
      %v206 = vadd.f32 %v204, %v205
      %v209 = vrot.slane %v206, 7
      %v210 = vsel %vm183, %v200, %v209
      %v212 = vadd.f32 %v192, %v210
      %213 = vst.msk [vmem:[#allocation4] sm:$0x3] %vm190, %v212
    $region41: #{tpu_custom_call.1} parent=1 // pred_fallthru
      _
    // Predicated region
    $region42: #{tpu_custom_call.1} parent=1 // pred_check
      _
    $region43: #{tpu_custom_call.1} parent=1 // pred_check_branch
      %215 = sbr.rel (%p66) target = $region45
    $region44: #{tpu_custom_call.1} parent=1 // pred_region
      %v216 = vld [vmem:[#allocation3] sm:$0x3]
      %v217 = vmul.f32 %v216, 0.125
      %v218 = vld [vmem:[#allocation4] sm:$0x3]
      %v219 = vmul.f32 %v218, 0.125
      %v220 = vmul.f32 %v217, %v217
      %v221 = vsub.f32 %v219, %v220
      %v222 = vmax.f32 %v221, 0.0
      %v223 = vadd.f32 %v222, 1e-05
      %v224 = vrsqrt.pop %v223
      %v225 = vmul.f32 %v224, %v223
      %v226 = vmul.f32 %v225, %v224
      %v227 = vmul.f32 0.5, %v226
      %v228 = vsub.f32 1.5, %v227
      %v229 = vmul.f32 %v224, %v228
      %vm230 = vweird.f32 %v223
      %vm231 = vweird.f32 %v224
      %vm232 = vmor %vm230, %vm231
      %v233 = vsel %vm232, %v224, %v229
      %v234 = vld [vmem:[#allocation10] sm:$0x3]
      %v235 = vmul.f32 %v234, %v233
      %v236 = vld [vmem:[%s3] sm:$0x3]
      %v237 = vmul.f32 %v217, %v235
      %v238 = vsub.f32 %v236, %v237
      %v239 = vlaneseq
      %vm240 = vcmp.ge.s32.totalorder %v239, 0
      %vm241 = vcmp.lt.s32.totalorder %v239, 256
      %vm242 = vmand %vm240, %vm241
      %243 = vst.msk [vmem:[#allocation12] ss:$2 sm:$0x3] %vm242, %v235
      %s244 = scalar_lea.vmem [#allocation12], 1
      %245 = vst.msk [vmem:[%s244] ss:$2 sm:$0x3] %vm242, %v238
    $region45: #{tpu_custom_call.1} parent=1 // pred_fallthru
      _
    // Predicated region
    $region46: #{tpu_custom_call.1} parent=1 // pred_check
      _
    $region47: #{tpu_custom_call.1} parent=1 // pred_check_branch
      %247 = sbr.rel (0) target = $region49
    $region48: #{tpu_custom_call.1} parent=1 // pred_region
      %249 = vsyncadd [#allocation7], 0
      %s251 = sshll.u32 [#allocation11], 4
      %s252 = int_to_ptr.vmem [resolvable:$true] %s251
      %s253 = sshll.u32 %s4, 4
      %s254 = int_to_ptr.hbm [resolvable:$true] %s253
      %256 = dma.vmem_to_hbm [thread:$0]  %s252, 256, %s254, [#allocation7]
    $region49: #{tpu_custom_call.1} parent=1 // pred_fallthru
      _
    // Predicated region
    $region50: #{tpu_custom_call.1} parent=1 // pred_check
      _
    $region51: #{tpu_custom_call.1} parent=1 // pred_check_branch
      %258 = sbr.rel (0) target = $region53
    $region52: #{tpu_custom_call.1} parent=1 // pred_region
      %260 = vsyncadd [#allocation13], 0
      %s262 = sshll.u32 [#allocation12], 4
      %s263 = int_to_ptr.vmem [resolvable:$true] %s262
      %s264 = sshll.u32 %s5, 4
      %s265 = int_to_ptr.hbm [resolvable:$true] %s264
      %267 = dma.vmem_to_hbm [thread:$0]  %s263, 64, %s265, [#allocation13]
    $region53: #{tpu_custom_call.1} parent=1 // pred_fallthru
      _
    // Predicated region
    $region54: #{tpu_custom_call.1} parent=1 // pred_check
      _
    $region55: #{tpu_custom_call.1} parent=1 // pred_check_branch
      %269 = sbr.rel (0) target = $region57
    $region56: #{tpu_custom_call.1} parent=1 // pred_region
      %271 = dma.done [#allocation7], 256
    $region57: #{tpu_custom_call.1} parent=1 // pred_fallthru
      _
    // Predicated region
    $region58: #{tpu_custom_call.1} parent=1 // pred_check
      _
    $region59: #{tpu_custom_call.1} parent=1 // pred_check_branch
      %273 = sbr.rel (0) target = $region61
    $region60: #{tpu_custom_call.1} parent=1 // pred_region
      %275 = dma.done [#allocation13], 64
    $region61: #{tpu_custom_call.1} parent=1 // pred_fallthru
      _
    %276 = vsyncpa [#allocation6], 1
    %277 = vsyncpa [#allocation9], 1
    %278 = vsyncpa [#allocation7], 1
    %279 = vsyncpa [#allocation13], 1

</llo_original>
